<compile_context>
chip_gen: v7x
topology: tpu7x:2x2x1
jax: 0.10.0
libtpu: 0.0.40
codegen_flags: <defaults>
</compile_context>

<pallas_src>
import functools

import jax
import jax.numpy as jnp
from jax.experimental import pallas as pl
from jax.experimental.pallas import tpu as pltpu

# Plain Python float "minus infinity" that stays finite under exp/max.
# (A jnp scalar here would become a captured constant inside the kernel.)
_NEG = -1.0e30


def _round_up(x: int, m: int) -> int:
    return ((x + m - 1) // m) * m


def _fused_ce_kernel(a_ref, b_ref, img_lse_ref, gph_lse_ref, m_ref, l_ref,
                     *, tb: int, n_valid: int, masked: bool):
    """One (row-tile i, col-tile j) step of the fused two-direction CLIP CE.

    a_ref       : (tb, D) image features, already multiplied by logit_scale.
    b_ref       : (tb, D) graph features.
    img_lse_ref : (tb, 1)  full logsumexp over all graph columns for the image
                  rows of tile i (online LSE carried in m_ref/l_ref across j,
                  written at the last column tile).
    gph_lse_ref : (1, 1, 1, tb)  per-tile logsumexp over the tb image columns
                  of tile i for the graph rows of tile j (merged over i in the
                  wrapper; keeps the i grid axis "parallel").
    m_ref,l_ref : (tb, 1) f32 online-LSE state for the image direction.
    """
    i = pl.program_id(0)
    j = pl.program_id(1)
    nj = pl.num_programs(1)

    @pl.when(j == 0)
    def _init():
        m_ref[...] = jnp.full(m_ref.shape, _NEG, jnp.float32)
        l_ref[...] = jnp.zeros(l_ref.shape, jnp.float32)

    a = a_ref[...]                      # (tb, D), native dtype, pre-scaled
    b = b_ref[...]                      # (tb, D), native dtype

    # (tb, tb) logits tile on the MXU, contracting dim 1 of both operands
    # (no transpose of either operand).  HIGHEST precision for f32 inputs so
    # the result matches the f32 reference (also honored in interpret mode).
    prec = jax.lax.Precision.HIGHEST if a.dtype == jnp.float32 else None
    s = jax.lax.dot_general(
        a, b,
        dimension_numbers=(((1,), (1,)), ((), ())),
        preferred_element_type=jnp.float32,
        precision=prec)

    # ---- image direction: online LSE over lanes (columns = graph index) ----
    if masked:  # static: only compiled in when N was padded
        col = j * tb + jax.lax.broadcasted_iota(jnp.int32, s.shape, 1)
        s_img = jnp.where(col < n_valid, s, _NEG)
    else:
        s_img = s
    tile_max = jnp.max(s_img, axis=1, keepdims=True)            # (tb, 1)
    m_new = jnp.maximum(m_ref[...], tile_max)
    l_ref[...] = (l_ref[...] * jnp.exp(m_ref[...] - m_new)
                  + jnp.sum(jnp.exp(s_img - m_new), axis=1, keepdims=True))
    m_ref[...] = m_new

    @pl.when(j == nj - 1)
    def _finalize_img():
        img_lse_ref[...] = m_ref[...] + jnp.log(l_ref[...])

    # ---- graph direction: per-tile LSE over sublanes (rows = image index) --
    if masked:
        row = i * tb + jax.lax.broadcasted_iota(jnp.int32, s.shape, 0)
        s_gph = jnp.where(row < n_valid, s, _NEG)
    else:
        s_gph = s
    cmax = jnp.max(s_gph, axis=0, keepdims=True)                 # (1, tb)
    csum = jnp.sum(jnp.exp(s_gph - cmax), axis=0, keepdims=True)
    gph_lse_ref[...] = (cmax + jnp.log(csum)).reshape(1, 1, 1, tb)


@functools.partial(jax.jit, static_argnames=("tile",))
def clip_loss(image_features, graph_features, logit_scale, *, tile=512):
    """CLIP contrastive loss. image/graph features: (N, D); logit_scale: scalar."""
    n, d = image_features.shape
    feat_dtype = image_features.dtype
    itemsize = jnp.dtype(feat_dtype).itemsize
    sublane = {4: 8, 2: 16, 1: 32}.get(itemsize, 8)

    tb = tile if n >= tile else _round_up(n, sublane)
    n_pad = _round_up(n, tb)
    pad = n_pad - n
    gi = n_pad // tb

    scale = jnp.asarray(logit_scale, jnp.float32)
    # Fold logit_scale into the image operand ONCE (O(N*D)); keeps the MXU
    # feed in the features' native dtype and never scales the (N, N) product.
    a = (image_features.astype(jnp.float32) * scale).astype(feat_dtype)
    b = graph_features
    # Diagonal (labels = arange(N)) term, identical for both CE directions.
    diag = jnp.sum(a.astype(jnp.float32) * b.astype(jnp.float32), axis=1)  # (n,)

    if pad:
        a = jnp.pad(a, ((0, pad), (0, 0)))
        b = jnp.pad(b, ((0, pad), (0, 0)))

    kernel = functools.partial(
        _fused_ce_kernel, tb=tb, n_valid=n, masked=pad > 0)

    # VMEM budget: double-buffered feature blocks + (tb, tb) temporaries.
    est = (2 * 2 * tb * d * itemsize      # A, B blocks, double-buffered
           + 8 * tb * tb * 4              # s / exp / mask temporaries
           + 8 * tb * 4)                  # scratch + small output blocks
    vmem_limit = int(min(max(2 * est, 32 * 1024 * 1024), 64 * 1024 * 1024))

    cost = pl.CostEstimate(
        flops=2 * n_pad * n_pad * d,
        transcendentals=2 * n_pad * n_pad,
        bytes_accessed=(itemsize * (n_pad * d + gi * n_pad * d)
                        + 4 * (n_pad + gi * n_pad)))

    img_lse, gph_parts = pl.pallas_call(
        kernel,
        out_shape=(
            jax.ShapeDtypeStruct((n_pad, 1), jnp.float32),        # image LSE
            jax.ShapeDtypeStruct((gi, gi, 1, tb), jnp.float32),   # graph partial LSE
        ),
        grid_spec=pltpu.PrefetchScalarGridSpec(
            num_scalar_prefetch=0,
            grid=(gi, gi),
            in_specs=[
                pl.BlockSpec((tb, d), lambda i, j: (i, 0)),       # image rows
                pl.BlockSpec((tb, d), lambda i, j: (j, 0)),       # graph rows
            ],
            out_specs=[
                pl.BlockSpec((tb, 1), lambda i, j: (i, 0)),
                pl.BlockSpec((1, 1, 1, tb), lambda i, j: (i, j, 0, 0)),
            ],
            scratch_shapes=[
                pltpu.VMEM((tb, 1), jnp.float32),   # running max m (image dir)
                pltpu.VMEM((tb, 1), jnp.float32),   # running sum l (image dir)
            ],
        ),
        compiler_params=pltpu.CompilerParams(
            dimension_semantics=("parallel", "arbitrary"),
            vmem_limit_bytes=vmem_limit),
        cost_estimate=cost,
    )(a, b)

    # Merge the graph-direction per-tile partial LSEs over the image (i) axis.
    gph_lse = jax.nn.logsumexp(gph_parts.reshape(gi, n_pad), axis=0)  # (n_pad,)

    total = (jnp.sum(img_lse[:n, 0]) + jnp.sum(gph_lse[:n])
             - 2.0 * jnp.sum(diag))
    return total / (2.0 * n)


def _reference_clip_loss(image_features, graph_features, logit_scale):
    """Pure-JAX reference matching the PyTorch module semantics."""
    hp = jax.lax.Precision.HIGHEST
    logits_per_image = logit_scale * jnp.dot(
        image_features, graph_features.T, precision=hp)
    logits_per_graph = logit_scale * jnp.dot(
        graph_features, image_features.T, precision=hp)
    n = logits_per_image.shape[0]
    labels = jnp.arange(n)

    def ce(logits):
        lse = jax.nn.logsumexp(logits, axis=-1)
        picked = jnp.take_along_axis(logits, labels[:, None], axis=-1)[:, 0]
        return jnp.mean(lse - picked)

    return 0.5 * (ce(logits_per_image) + ce(logits_per_graph))


if __name__ == "__main__":
    key = jax.random.PRNGKey(0)
    logit_scale = jnp.exp(jnp.float32(0.07)) * 2.0  # fixed CLIP-style temperature

    k1, k2, k3, k4 = jax.random.split(key, 4)

    # Case 1: multi-tile grid, no padding (N=24, D=32, tile=8 -> 3x3 grid).
    img1 = jax.random.normal(k1, (24, 32), dtype=jnp.float32)
    gph1 = jax.random.normal(k2, (24, 32), dtype=jnp.float32)
    loss1 = jax.block_until_ready(clip_loss(img1, gph1, logit_scale, tile=8))
    ref1 = _reference_clip_loss(img1, gph1, logit_scale)
    assert jnp.allclose(loss1, ref1, atol=2e-4, rtol=2e-4), (loss1, ref1)

    # Case 2: ragged N exercising the padding/masking path (N=13 -> pad to 16).
    img2 = jax.random.normal(k3, (13, 32), dtype=jnp.float32)
    gph2 = jax.random.normal(k4, (13, 32), dtype=jnp.float32)
    loss2 = jax.block_until_ready(clip_loss(img2, gph2, logit_scale, tile=8))
    ref2 = _reference_clip_loss(img2, gph2, logit_scale)
    assert jnp.allclose(loss2, ref2, atol=2e-4, rtol=2e-4), (loss2, ref2)

    # Case 3: default (large) tile -> single-block grid path (N < tile).
    loss3 = jax.block_until_ready(clip_loss(img1, gph1, logit_scale))
    assert jnp.allclose(loss3, ref1, atol=2e-4, rtol=2e-4), (loss3, ref1)

    print("KERNEL_OK")
</pallas_src>

<mosaic_0001>
module attributes {stable_mosaic.version = 11 : i64} {
  func.func @_fused_ce_kernel(%arg0: i32, %arg1: i32, %arg2: memref<8x32xf32, #tpu.memory_space<vmem>>, %arg3: memref<8x32xf32, #tpu.memory_space<vmem>>, %arg4: memref<8x1xf32, #tpu.memory_space<vmem>>, %arg5: memref<1x1x1x8xf32, #tpu.memory_space<vmem>>, %arg6: memref<8x1xf32, #tpu.memory_space<vmem>>, %arg7: memref<8x1xf32, #tpu.memory_space<vmem>>) attributes {dimension_semantics = [#tpu.dimension_semantics<parallel>, #tpu.dimension_semantics<arbitrary>], iteration_bounds = array<i64: 3, 3>, scalar_prefetch = 0 : i64, scratch_operands = 2 : i64, tpu.core_type = #tpu.core_type<tc>, window_params = [{transform_indices = @transform_0, window_bounds = array<i64: 8, 32>}, {transform_indices = @transform_1, window_bounds = array<i64: 8, 32>}, {transform_indices = @transform_2, window_bounds = array<i64: 8, 1>}, {transform_indices = @transform_3, window_bounds = array<i64: 1, 1, 1, 8>}]} {
    %c0_i32 = arith.constant 0 : i32
    %0 = arith.cmpi eq, %arg1, %c0_i32 : i32
    %1 = arith.extui %0 : i1 to i32
    %c0_i32_0 = arith.constant 0 : i32
    %2 = arith.cmpi ne, %1, %c0_i32_0 : i32
    scf.if %2 {
      %cst_23 = arith.constant -1.000000e+30 : f32
      %37 = vector.broadcast %cst_23 : f32 to vector<8x1xf32>
      %c0_24 = arith.constant 0 : index
      %c0_25 = arith.constant 0 : index
      %38 = vector.load %arg6[%c0_24, %c0_25] : memref<8x1xf32, #tpu.memory_space<vmem>>, vector<8x1xf32>
      tpu.vector_store %arg6[%c0_24, %c0_25], %37 {strides = array<i32>} : memref<8x1xf32, #tpu.memory_space<vmem>>, vector<8x1xf32>,
      %cst_26 = arith.constant 0.000000e+00 : f32
      %39 = vector.broadcast %cst_26 : f32 to vector<8x1xf32>
      %c0_27 = arith.constant 0 : index
      %c0_28 = arith.constant 0 : index
      %40 = vector.load %arg7[%c0_27, %c0_28] : memref<8x1xf32, #tpu.memory_space<vmem>>, vector<8x1xf32>
      tpu.vector_store %arg7[%c0_27, %c0_28], %39 {strides = array<i32>} : memref<8x1xf32, #tpu.memory_space<vmem>>, vector<8x1xf32>,
    } else {
    }
    %c0 = arith.constant 0 : index
    %c0_1 = arith.constant 0 : index
    %3 = vector.load %arg2[%c0, %c0_1] : memref<8x32xf32, #tpu.memory_space<vmem>>, vector<8x32xf32>
    %c0_2 = arith.constant 0 : index
    %c0_3 = arith.constant 0 : index
    %4 = vector.load %arg3[%c0_2, %c0_3] : memref<8x32xf32, #tpu.memory_space<vmem>>, vector<8x32xf32>
    %cst = arith.constant dense<0.000000e+00> : vector<8x8xf32>
    %5 = tpu.matmul %3, %4, %cst {dimension_numbers = #tpu.dot_dimension_numbers<[1], [1], [0], [0], [0, 0, 1, 0], [], []>, precision = #tpu.contract_precision<fp32>} : vector<8x32xf32>, vector<8x32xf32>, vector<8x8xf32> -> vector<8x8xf32>
    %cst_4 = arith.constant dense<0xFF800000> : vector<8xf32>
    %6 = vector.multi_reduction <maximumf>, %5, %cst_4 [1] : vector<8x8xf32> to vector<8xf32>
    %7 = vector.shape_cast %6 : vector<8xf32> to vector<8x1xf32>
    %c0_5 = arith.constant 0 : index
    %c0_6 = arith.constant 0 : index
    %8 = vector.load %arg6[%c0_5, %c0_6] : memref<8x1xf32, #tpu.memory_space<vmem>>, vector<8x1xf32>
    %9 = arith.maximumf %8, %7 : vector<8x1xf32>
    %c0_7 = arith.constant 0 : index
    %c0_8 = arith.constant 0 : index
    %10 = vector.load %arg7[%c0_7, %c0_8] : memref<8x1xf32, #tpu.memory_space<vmem>>, vector<8x1xf32>
    %c0_9 = arith.constant 0 : index
    %c0_10 = arith.constant 0 : index
    %11 = vector.load %arg6[%c0_9, %c0_10] : memref<8x1xf32, #tpu.memory_space<vmem>>, vector<8x1xf32>
    %12 = arith.subf %11, %9 : vector<8x1xf32>
    %13 = math.exp %12 : vector<8x1xf32>
    %14 = arith.mulf %10, %13 : vector<8x1xf32>
    %15 = vector.broadcast %9 : vector<8x1xf32> to vector<8x8xf32>
    %16 = arith.subf %5, %15 : vector<8x8xf32>
    %17 = math.exp %16 : vector<8x8xf32>
    %cst_11 = arith.constant dense<0.000000e+00> : vector<8xf32>
    %18 = vector.multi_reduction <add>, %17, %cst_11 [1] : vector<8x8xf32> to vector<8xf32>
    %19 = vector.shape_cast %18 : vector<8xf32> to vector<8x1xf32>
    %20 = arith.addf %14, %19 : vector<8x1xf32>
    %c0_12 = arith.constant 0 : index
    %c0_13 = arith.constant 0 : index
    %21 = vector.load %arg7[%c0_12, %c0_13] : memref<8x1xf32, #tpu.memory_space<vmem>>, vector<8x1xf32>
    tpu.vector_store %arg7[%c0_12, %c0_13], %20 {strides = array<i32>} : memref<8x1xf32, #tpu.memory_space<vmem>>, vector<8x1xf32>,
    %c0_14 = arith.constant 0 : index
    %c0_15 = arith.constant 0 : index
    %22 = vector.load %arg6[%c0_14, %c0_15] : memref<8x1xf32, #tpu.memory_space<vmem>>, vector<8x1xf32>
    tpu.vector_store %arg6[%c0_14, %c0_15], %9 {strides = array<i32>} : memref<8x1xf32, #tpu.memory_space<vmem>>, vector<8x1xf32>,
    %c2_i32 = arith.constant 2 : i32
    %23 = arith.cmpi eq, %arg1, %c2_i32 : i32
    %24 = arith.extui %23 : i1 to i32
    %c0_i32_16 = arith.constant 0 : i32
    %25 = arith.cmpi ne, %24, %c0_i32_16 : i32
    scf.if %25 {
      %c0_23 = arith.constant 0 : index
      %c0_24 = arith.constant 0 : index
      %37 = vector.load %arg6[%c0_23, %c0_24] : memref<8x1xf32, #tpu.memory_space<vmem>>, vector<8x1xf32>
      %c0_25 = arith.constant 0 : index
      %c0_26 = arith.constant 0 : index
      %38 = vector.load %arg7[%c0_25, %c0_26] : memref<8x1xf32, #tpu.memory_space<vmem>>, vector<8x1xf32>
      %39 = math.log %38 : vector<8x1xf32>
      %40 = arith.addf %37, %39 : vector<8x1xf32>
      %c0_27 = arith.constant 0 : index
      %c0_28 = arith.constant 0 : index
      %41 = vector.load %arg4[%c0_27, %c0_28] : memref<8x1xf32, #tpu.memory_space<vmem>>, vector<8x1xf32>
      tpu.vector_store %arg4[%c0_27, %c0_28], %40 {strides = array<i32>} : memref<8x1xf32, #tpu.memory_space<vmem>>, vector<8x1xf32>,
    } else {
    }
    %cst_17 = arith.constant dense<0xFF800000> : vector<8xf32>
    %26 = vector.multi_reduction <maximumf>, %5, %cst_17 [0] : vector<8x8xf32> to vector<8xf32>
    %27 = vector.shape_cast %26 : vector<8xf32> to vector<1x8xf32>
    %28 = vector.broadcast %27 : vector<1x8xf32> to vector<8x8xf32>
    %29 = arith.subf %5, %28 : vector<8x8xf32>
    %30 = math.exp %29 : vector<8x8xf32>
    %cst_18 = arith.constant dense<0.000000e+00> : vector<8xf32>
    %31 = vector.multi_reduction <add>, %30, %cst_18 [0] : vector<8x8xf32> to vector<8xf32>
    %32 = vector.shape_cast %31 : vector<8xf32> to vector<1x8xf32>
    %33 = math.log %32 : vector<1x8xf32>
    %34 = arith.addf %27, %33 : vector<1x8xf32>
    %35 = vector.shape_cast %34 : vector<1x8xf32> to vector<1x1x1x8xf32>
    %c0_19 = arith.constant 0 : index
    %c0_20 = arith.constant 0 : index
    %c0_21 = arith.constant 0 : index
    %c0_22 = arith.constant 0 : index
    %36 = vector.load %arg5[%c0_19, %c0_20, %c0_21, %c0_22] : memref<1x1x1x8xf32, #tpu.memory_space<vmem>>, vector<1x1x1x8xf32>
    tpu.vector_store %arg5[%c0_19, %c0_20, %c0_21, %c0_22], %35 {strides = array<i32>} : memref<1x1x1x8xf32, #tpu.memory_space<vmem>>, vector<1x1x1x8xf32>,
    return
  }
  func.func @transform_0(%arg0: i32, %arg1: i32) -> (i32, i32) {
    %c0_i32 = arith.constant 0 : i32
    %c0_i32_0 = arith.constant 0 : i32
    return %arg0, %c0_i32 : i32, i32
  }
  func.func @transform_1(%arg0: i32, %arg1: i32) -> (i32, i32) {
    %c0_i32 = arith.constant 0 : i32
    %c0_i32_0 = arith.constant 0 : i32
    return %arg1, %c0_i32 : i32, i32
  }
  func.func @transform_2(%arg0: i32, %arg1: i32) -> (i32, i32) {
    %c0_i32 = arith.constant 0 : i32
    %c0_i32_0 = arith.constant 0 : i32
    return %arg0, %c0_i32 : i32, i32
  }
  func.func @transform_3(%arg0: i32, %arg1: i32) -> (i32, i32, i32, i32) {
    %c0_i32 = arith.constant 0 : i32
    %c0_i32_0 = arith.constant 0 : i32
    %c0_i32_1 = arith.constant 0 : i32
    return %arg0, %arg1, %c0_i32, %c0_i32_0 : i32, i32, i32, i32
  }
}

</mosaic_0001>

<llo_original>
// kernel: clip_loss.1
$region0: #{clip_loss.1}
  #allocation0 [shape = 'u32[]', space=smem, size = 0x4, offset = 0x4, fixed_abs, tag = 'smem constant byte address 0x4 - core index']
  #allocation1 [shape = 'u32[144,128]{1,0:T(1,128)}', space=vmem, size = 0x12000, scoped, tag = 'internal scratch']
  #allocation2 [shape = 'f32[8,1]{1,0:T(8,128)}', space=vmem, size = 0x1000, scoped, tag = 'scratch operand']
  #allocation3 [shape = 'f32[8,1]{1,0:T(8,128)}', space=vmem, size = 0x1000, scoped, tag = 'scratch operand']
  %s0 = inlined_call_operand.vmem [shape: f32[24,32], index: 0, kind: input, shape index: {}]
  %s1 = inlined_call_operand.vmem [shape: f32[24,32], index: 1, kind: input, shape index: {}]
  %s2 = inlined_call_operand.vmem [shape: f32[24,1], index: 2, kind: output, shape index: {0}]
  %s3 = inlined_call_operand.vmem [shape: f32[3,3,1,8], index: 3, kind: output, shape index: {1}]
  %4 = xla_tuple %s2, %s3
  %s5 = sld [smem:[#allocation0]]
  $region57: #{clip_loss.1} parent=0
    _
  %s7 = ssub.s32 1, %s5
  %s8 = scalar_select 0, %s7, %s5
  loop: start=0, step=1, limit=11
  $region2: #{clip_loss.1} parent=0 // loop_pre_header
    _
  $region3: #{clip_loss.1} parent=0 // loop_header
    %s10 = sphi 0, %s14
    %p11 = scmp.ge.s32.totalorder %s10, 11
    %s17 = sphi 0, %s29
    %s18 = sphi 0, %s25
    %s19 = sphi 0, %s17
    %s20 = sphi 0, %s18
    %s21 = sphi 0, %s19
    %s22 = sphi 0, %s20
    %s32 = sphi 0, %s34
    %s35 = sphi 0, %s32
    %s36 = sphi 0, %s35
    %s52 = sphi 0, %s36
    %s58 = sphi 0, %s60
    %s61 = sphi 0, %s58
    %s62 = sphi 0, %s61
    %s78 = sphi 0, %s62
    %s84 = sphi 0, %s86
    %s87 = sphi 0, %s84
    %s88 = sphi 0, %s87
    %s104 = sphi 0, %s88
    %s112 = sphi 0, %s114
    %s115 = sphi 0, %s112
    %s116 = sphi 0, %s115
    %s132 = sphi 0, %s116
  $region4: #{clip_loss.1} parent=0 // loop_header_branch
    %13 = sbr.rel (%p11) target = $region8
  $region5: #{clip_loss.1} parent=0 // loop_body
    %s15 = ssub.s32 %s10, 1
    %s16 = ssub.s32 %s10, 2
    %s23 = sadd.s32 1, %s18
    %p24 = scmp.ge.s32.totalorder %s23, 3
    %s25 = scalar_select %p24, 0, %s23
    %s26 = sadd.s32 1, %s17
    %s27 = scalar_select %p24, %s26, %s17
    %p28 = scmp.ge.s32.totalorder %s27, 3
    %s29 = scalar_select %p28, 0, %s27
    %s30 = ssub.s32 %s17, %s29
    %p31 = scmp.eq.s32.totalorder %s30, 0
    %s33 = sadd.s32 %s32, 1
    %s34 = scalar_select %p31, %s32, %s33
    %p37 = pneg %p31
    %p38 = scmp.eq.s32.totalorder %s10, 8
    %p39 = por %p37, %p38
    %p40 = scmp.ne.s32.totalorder %s32, %s35
    %p41 = scmp.eq.s32.totalorder %s10, 0
    %p42 = por %p40, %p41
    %p43 = scmp.ne.s32.totalorder %s32, %s35
    %p44 = scmp.eq.s32.totalorder %s15, 8
    %p45 = por %p43, %p44
    %p46 = scmp.ne.s32.totalorder %s35, %s36
    %p47 = scmp.eq.s32.totalorder %s15, 0
    %p48 = por %p46, %p47
    %p49 = scmp.ne.s32.totalorder %s35, %s36
    %p50 = scmp.eq.s32.totalorder %s16, 8
    %p51 = por %p49, %p50
    %p53 = scmp.ne.s32.totalorder %s36, %s52
    %p54 = scmp.eq.s32.totalorder %s16, 0
    %p55 = por %p53, %p54
    %s56 = ssub.s32 %s18, %s25
    %p57 = scmp.eq.s32.totalorder %s56, 0
    %s59 = sadd.s32 %s58, 1
    %s60 = scalar_select %p57, %s58, %s59
    %p63 = pneg %p57
    %p64 = scmp.eq.s32.totalorder %s10, 8
    %p65 = por %p63, %p64
    %p66 = scmp.ne.s32.totalorder %s58, %s61
    %p67 = scmp.eq.s32.totalorder %s10, 0
    %p68 = por %p66, %p67
    %p69 = scmp.ne.s32.totalorder %s58, %s61
    %p70 = scmp.eq.s32.totalorder %s15, 8
    %p71 = por %p69, %p70
    %p72 = scmp.ne.s32.totalorder %s61, %s62
    %p73 = scmp.eq.s32.totalorder %s15, 0
    %p74 = por %p72, %p73
    %p75 = scmp.ne.s32.totalorder %s61, %s62
    %p76 = scmp.eq.s32.totalorder %s16, 8
    %p77 = por %p75, %p76
    %p79 = scmp.ne.s32.totalorder %s62, %s78
    %p80 = scmp.eq.s32.totalorder %s16, 0
    %p81 = por %p79, %p80
    %s82 = ssub.s32 %s17, %s29
    %p83 = scmp.eq.s32.totalorder %s82, 0
    %s85 = sadd.s32 %s84, 1
    %s86 = scalar_select %p83, %s84, %s85
    %p89 = pneg %p83
    %p90 = scmp.eq.s32.totalorder %s10, 8
    %p91 = por %p89, %p90
    %p92 = scmp.ne.s32.totalorder %s84, %s87
    %p93 = scmp.eq.s32.totalorder %s10, 0
    %p94 = por %p92, %p93
    %p95 = scmp.ne.s32.totalorder %s84, %s87
    %p96 = scmp.eq.s32.totalorder %s15, 8
    %p97 = por %p95, %p96
    %p98 = scmp.ne.s32.totalorder %s87, %s88
    %p99 = scmp.eq.s32.totalorder %s15, 0
    %p100 = por %p98, %p99
    %p101 = scmp.ne.s32.totalorder %s87, %s88
    %p102 = scmp.eq.s32.totalorder %s16, 8
    %p103 = por %p101, %p102
    %p105 = scmp.ne.s32.totalorder %s88, %s104
    %p106 = scmp.eq.s32.totalorder %s16, 0
    %p107 = por %p105, %p106
    %s108 = ssub.s32 %s17, %s29
    %s109 = ssub.s32 %s18, %s25
    %s110 = sor.u32 %s108, %s109
    %p111 = scmp.eq.s32.totalorder %s110, 0
    %s113 = sadd.s32 %s112, 1
    %s114 = scalar_select %p111, %s112, %s113
    %p117 = pneg %p111
    %p118 = scmp.eq.s32.totalorder %s10, 8
    %p119 = por %p117, %p118
    %p120 = scmp.ne.s32.totalorder %s112, %s115
    %p121 = scmp.eq.s32.totalorder %s10, 0
    %p122 = por %p120, %p121
    %p123 = scmp.ne.s32.totalorder %s112, %s115
    %p124 = scmp.eq.s32.totalorder %s15, 8
    %p125 = por %p123, %p124
    %p126 = scmp.ne.s32.totalorder %s115, %s116
    %p127 = scmp.eq.s32.totalorder %s15, 0
    %p128 = por %p126, %p127
    %p129 = scmp.ne.s32.totalorder %s115, %s116
    %p130 = scmp.eq.s32.totalorder %s16, 8
    %p131 = por %p129, %p130
    %p133 = scmp.ne.s32.totalorder %s116, %s132
    %p134 = scmp.eq.s32.totalorder %s16, 0
    %p135 = por %p133, %p134
    %p136 = scmp.le.s32.totalorder 1, %s10
    %p137 = scmp.lt.s32.totalorder %s10, 10
    %p138 = pnand %p136, %p137
    %p139 = pneg %p138
    // Predicated region
    $region9: #{clip_loss.1} parent=5 // pred_check
      _
    $region10: #{clip_loss.1} parent=5 // pred_check_branch
      %141 = sbr.rel (%p138) target = $region12
    $region11: #{clip_loss.1} parent=5 // pred_region
      %s142 = ssub.s32 %s10, 1
    $region12: #{clip_loss.1} parent=5 // pred_fallthru
      _
    %p143 = scmp.lt.s32.totalorder %s10, 9
    // Predicated region
    $region13: #{clip_loss.1} parent=5 // pred_check
      %p144 = pneg %p143
    $region14: #{clip_loss.1} parent=5 // pred_check_branch
      %146 = sbr.rel (%p144) target = $region16
    $region15: #{clip_loss.1} parent=5 // pred_region
      // Predicated region
      $region17: #{clip_loss.1} parent=15 // pred_check
        %p147 = pneg %p42
      $region18: #{clip_loss.1} parent=15 // pred_check_branch
        %149 = sbr.rel (%p147) target = $region20
      $region19: #{clip_loss.1} parent=15 // pred_region
        %p150 = scmp.lt.s32.totalorder %s17, 2
        %s151 = scalar_select %p150, %s17, 2
        %s152 = smul.addr %s151, 8
        %s153 = scalar_lea.vmem %s0, %s152
      $region20: #{clip_loss.1} parent=15 // pred_fallthru
        _
      // Predicated region
      $region21: #{clip_loss.1} parent=15 // pred_check
        %p154 = pneg %p68
      $region22: #{clip_loss.1} parent=15 // pred_check_branch
        %156 = sbr.rel (%p154) target = $region24
      $region23: #{clip_loss.1} parent=15 // pred_region
        %p157 = scmp.lt.s32.totalorder %s18, 2
        %s158 = scalar_select %p157, %s18, 2
        %s159 = smul.addr %s158, 8
        %s160 = scalar_lea.vmem %s1, %s159
      $region24: #{clip_loss.1} parent=15 // pred_fallthru
        _
    $region16: #{clip_loss.1} parent=5 // pred_fallthru
      _
    %p161 = scmp.le.s32.totalorder 1, %s10
    %p162 = scmp.lt.s32.totalorder %s10, 10
    %p163 = pnand %p161, %p162
    %p164 = pneg %p163
    // Predicated region
    $region25: #{clip_loss.1} parent=5 // pred_check
      _
    $region26: #{clip_loss.1} parent=5 // pred_check_branch
      %166 = sbr.rel (%p163) target = $region28
    $region27: #{clip_loss.1} parent=5 // pred_region
      %s167 = ssub.s32 %s10, 1
      %p168 = scmp.lt.s32.totalorder %s19, 2
      %s169 = scalar_select %p168, %s19, 2
      %s170 = smul.addr %s169, 8
      %s171 = scalar_lea.vmem %s0, %s170
      %p172 = pneg %p48
      %p173 = pneg %p45
      %p174 = scmp.lt.s32.totalorder %s20, 2
      %s175 = scalar_select %p174, %s20, 2
      %s176 = smul.addr %s175, 8
      %s177 = scalar_lea.vmem %s1, %s176
      %p178 = pneg %p74
      %p179 = pneg %p71
      %p180 = pneg %p100
      %p181 = pneg %p97
      %p182 = scmp.lt.s32.totalorder %s19, 2
      %s183 = scalar_select %p182, %s19, 2
      %s184 = smul.addr %s183, 8
      %s185 = scalar_lea.vmem %s2, %s184
      %p186 = pneg %p128
      %p187 = pneg %p125
      %p188 = scmp.lt.s32.totalorder %s19, 2
      %s189 = scalar_select %p188, %s19, 2
      %p190 = scmp.lt.s32.totalorder %s20, 2
      %s191 = scalar_select %p190, %s20, 2
      %s192 = smul.addr %s189, 3
      %s193 = sadd.s32 %s191, %s192
      %s194 = scalar_lea.vmem %s3, %s193
      %p195 = scmp.lt.s32.totalorder %s19, 2
      %s196 = scalar_select %p195, %s19, 2
      %s197 = smul.addr %s196, 8
      %s198 = scalar_lea.vmem %s0, %s197
      %p199 = scmp.lt.s32.totalorder %s20, 2
      %s200 = scalar_select %p199, %s20, 2
      %s201 = smul.addr %s200, 8
      %s202 = scalar_lea.vmem %s1, %s201
      %p203 = scmp.lt.s32.totalorder %s19, 2
      %s204 = scalar_select %p203, %s19, 2
      %s205 = smul.addr %s204, 8
      %s206 = scalar_lea.vmem %s2, %s205
      %p207 = scmp.lt.s32.totalorder %s19, 2
      %s208 = scalar_select %p207, %s19, 2
      %p209 = scmp.lt.s32.totalorder %s20, 2
      %s210 = scalar_select %p209, %s20, 2
      %s211 = smul.addr %s208, 3
      %s212 = sadd.s32 %s210, %s211
      %s213 = scalar_lea.vmem %s3, %s212
      %p214 = scmp.eq.s32.totalorder %s20, 0
      // Predicated region
      $region29: #{clip_loss.1} parent=27 // pred_check
        %p215 = pneg %p214
      $region30: #{clip_loss.1} parent=27 // pred_check_branch
        %217 = sbr.rel (%p215) target = $region32
      $region31: #{clip_loss.1} parent=27 // pred_region
        %vm218 = vcmask 7168
        %219 = vst.msk [vmem:[#allocation2] sm:$0xff] %vm218, -1e+30
        %220 = vst.msk [vmem:[#allocation3] sm:$0xff] %vm218, 0.0
      $region32: #{clip_loss.1} parent=27 // pred_fallthru
        _
      %v221 = vld [vmem:[%s198] sm:$0xff]
      %v222 = vld [vmem:[%s202] sm:$0xff]
      %vm223 = vcmask 261120
      %v225 = vsel %vm223, %v221, 0
      %v228 = vsel %vm223, %v222, 0
      %230 = vmatprep.subr.mxu0 0.0
      %v231 = vand.u32 %v228, 4294901760
      %232 = vmatpush1.xpose.msra.mxu0 %v231
      %233 = vmatprep.subr.mxu0 0.0
      %234 = vmatpush1.xpose.msra.mxu0 0.0
      %235 = vmatprep.subr.mxu0 0.0
      %236 = vmatpush1.xpose.msra.mxu0 0.0
      %237 = vmatprep.subr.mxu0 0.0
      %238 = vmatpush1.xpose.msra.mxu0 0.0
      %239 = vmatprep.subr.mxu0 0.0
      %240 = vmatpush1.xpose.msra.mxu0 0.0
      %241 = vmatprep.subr.mxu0 0.0
      %242 = vmatpush1.xpose.msra.mxu0 0.0
      %243 = vmatprep.subr.mxu0 0.0
      %244 = vmatpush1.xpose.msra.mxu0 0.0
      %245 = vmatprep.subr.mxu0 0.0
      %246 = vmatpush1.xpose.msra.mxu0 0.0
      %247 = vmatprep.subr.mxu0 0.0
      %248 = vmatpush1.xpose.msra.mxu0 0.0
      %249 = vmatprep.subr.mxu0 0.0
      %250 = vmatpush1.xpose.msra.mxu0 0.0
      %251 = vmatprep.subr.mxu0 0.0
      %252 = vmatpush1.xpose.msra.mxu0 0.0
      %253 = vmatprep.subr.mxu0 0.0
      %254 = vmatpush1.xpose.msra.mxu0 0.0
      %255 = vmatprep.subr.mxu0 0.0
      %256 = vmatpush1.xpose.msra.mxu0 0.0
      %257 = vmatprep.subr.mxu0 0.0
      %258 = vmatpush1.xpose.msra.mxu0 0.0
      %259 = vmatprep.subr.mxu0 0.0
      %260 = vmatpush1.xpose.msra.mxu0 0.0
      %261 = vmatprep.subr.mxu0 0.0
      %262 = vmatpush1.xpose.msra.mxu0 0.0
      %263 = vmatprep.subr.mxu0 0.0
      %264 = vmatpush1.xpose.msra.mxu0 0.0
      %265 = vmatprep.subr.mxu0 0.0
      %266 = vmatpush1.xpose.msra.mxu0 0.0
      %267 = vmatprep.subr.mxu0 0.0
      %268 = vmatpush1.xpose.msra.mxu0 0.0
      %269 = vmatprep.subr.mxu0 0.0
      %270 = vmatpush1.xpose.msra.mxu0 0.0
      %271 = vmatprep.subr.mxu0 0.0
      %272 = vmatpush1.xpose.msra.mxu0 0.0
      %273 = vmatprep.subr.mxu0 0.0
      %274 = vmatpush1.xpose.msra.mxu0 0.0
      %275 = vmatprep.subr.mxu0 0.0
      %276 = vmatpush1.xpose.msra.mxu0 0.0
      %277 = vmatprep.subr.mxu0 0.0
      %278 = vmatpush1.xpose.msra.mxu0 0.0
      %279 = vmatprep.subr.mxu0 0.0
      %280 = vmatpush1.xpose.msra.mxu0 0.0
      %281 = vmatprep.subr.mxu0 0.0
      %282 = vmatpush1.xpose.msra.mxu0 0.0
      %283 = vmatprep.subr.mxu0 0.0
      %284 = vmatpush1.xpose.msra.mxu0 0.0
      %285 = vmatprep.subr.mxu0 0.0
      %286 = vmatpush1.xpose.msra.mxu0 0.0
      %287 = vmatprep.subr.mxu0 0.0
      %288 = vmatpush1.xpose.msra.mxu0 0.0
      %289 = vmatprep.subr.mxu0 0.0
      %290 = vmatpush1.xpose.msra.mxu0 0.0
      %291 = vmatprep.subr.mxu0 0.0
      %292 = vmatpush1.xpose.msra.mxu0 0.0
      %293 = vmatprep.subr.mxu0 0.0
      %294 = vmatpush1.xpose.msra.mxu0 0.0
      %295 = vmatprep.mubr.f32.mxu0 0.0
      %v296 = vand.u32 %v225, 4294901760
      %v297 = vsub.f32 %v225, %v296
      %v298 = vand.u32 %v297, 4294901760
      %v299 = vsub.f32 %v297, %v298
      %v300 = vand.u32 %v299, 4294901760
      %301 = vmatmul.mubr.f32.gmra.mrb[0].mxu0 %v300
      %v302 = vpop.f32.mrb[0].mxu0
      %v303 = vadd.f32 0.0, %v302
      %v304 = vpop.f32.mrb[0].mxu0
      %305 = vdwg.mxu0
      %306 = vmatprep.subr.mxu0 0.0
      %v307 = vand.u32 %v228, 4294901760
      %v308 = vsub.f32 %v228, %v307
      %v309 = vand.u32 %v308, 4294901760
      %v310 = vsub.f32 %v308, %v309
      %v311 = vand.u32 %v310, 4294901760
      %312 = vmatpush1.xpose.msra.mxu0 %v311
      %313 = vmatprep.subr.mxu0 0.0
      %314 = vmatpush1.xpose.msra.mxu0 0.0
      %315 = vmatprep.subr.mxu0 0.0
      %316 = vmatpush1.xpose.msra.mxu0 0.0
      %317 = vmatprep.subr.mxu0 0.0
      %318 = vmatpush1.xpose.msra.mxu0 0.0
      %319 = vmatprep.subr.mxu0 0.0
      %320 = vmatpush1.xpose.msra.mxu0 0.0
      %321 = vmatprep.subr.mxu0 0.0
      %322 = vmatpush1.xpose.msra.mxu0 0.0
      %323 = vmatprep.subr.mxu0 0.0
      %324 = vmatpush1.xpose.msra.mxu0 0.0
      %325 = vmatprep.subr.mxu0 0.0
      %326 = vmatpush1.xpose.msra.mxu0 0.0
      %327 = vmatprep.subr.mxu0 0.0
      %328 = vmatpush1.xpose.msra.mxu0 0.0
      %329 = vmatprep.subr.mxu0 0.0
      %330 = vmatpush1.xpose.msra.mxu0 0.0
      %331 = vmatprep.subr.mxu0 0.0
      %332 = vmatpush1.xpose.msra.mxu0 0.0
      %333 = vmatprep.subr.mxu0 0.0
      %334 = vmatpush1.xpose.msra.mxu0 0.0
      %335 = vmatprep.subr.mxu0 0.0
      %336 = vmatpush1.xpose.msra.mxu0 0.0
      %337 = vmatprep.subr.mxu0 0.0
      %338 = vmatpush1.xpose.msra.mxu0 0.0
      %339 = vmatprep.subr.mxu0 0.0
      %340 = vmatpush1.xpose.msra.mxu0 0.0
      %341 = vmatprep.subr.mxu0 0.0
      %342 = vmatpush1.xpose.msra.mxu0 0.0
      %343 = vmatprep.subr.mxu0 0.0
      %344 = vmatpush1.xpose.msra.mxu0 0.0
      %345 = vmatprep.subr.mxu0 0.0
      %346 = vmatpush1.xpose.msra.mxu0 0.0
      %347 = vmatprep.subr.mxu0 0.0
      %348 = vmatpush1.xpose.msra.mxu0 0.0
      %349 = vmatprep.subr.mxu0 0.0
      %350 = vmatpush1.xpose.msra.mxu0 0.0
      %351 = vmatprep.subr.mxu0 0.0
      %352 = vmatpush1.xpose.msra.mxu0 0.0
      %353 = vmatprep.subr.mxu0 0.0
      %354 = vmatpush1.xpose.msra.mxu0 0.0
      %355 = vmatprep.subr.mxu0 0.0
      %356 = vmatpush1.xpose.msra.mxu0 0.0
      %357 = vmatprep.subr.mxu0 0.0
      %358 = vmatpush1.xpose.msra.mxu0 0.0
      %359 = vmatprep.subr.mxu0 0.0
      %360 = vmatpush1.xpose.msra.mxu0 0.0
      %361 = vmatprep.subr.mxu0 0.0
      %362 = vmatpush1.xpose.msra.mxu0 0.0
      %363 = vmatprep.subr.mxu0 0.0
      %364 = vmatpush1.xpose.msra.mxu0 0.0
      %365 = vmatprep.subr.mxu0 0.0
      %366 = vmatpush1.xpose.msra.mxu0 0.0
      %367 = vmatprep.subr.mxu0 0.0
      %368 = vmatpush1.xpose.msra.mxu0 0.0
      %369 = vmatprep.subr.mxu0 0.0
      %370 = vmatpush1.xpose.msra.mxu0 0.0
      %371 = vmatprep.subr.mxu0 0.0
      %372 = vmatpush1.xpose.msra.mxu0 0.0
      %373 = vmatprep.subr.mxu0 0.0
      %374 = vmatpush1.xpose.msra.mxu0 0.0
      %375 = vmatprep.mubr.f32.mxu0 0.0
      %v376 = vand.u32 %v225, 4294901760
      %377 = vmatmul.mubr.f32.gmra.mrb[0].mxu0 %v376
      %v378 = vpop.f32.mrb[0].mxu0
      %v379 = vadd.f32 %v303, %v378
      %v380 = vpop.f32.mrb[0].mxu0
      %381 = vdwg.mxu0
      %382 = vmatprep.subr.mxu0 0.0
      %v383 = vand.u32 %v228, 4294901760
      %v384 = vsub.f32 %v228, %v383
      %385 = vmatpush1.xpose.msra.mxu0 %v384
      %386 = vmatprep.subr.mxu0 0.0
      %387 = vmatpush1.xpose.msra.mxu0 0.0
      %388 = vmatprep.subr.mxu0 0.0
      %389 = vmatpush1.xpose.msra.mxu0 0.0
      %390 = vmatprep.subr.mxu0 0.0
      %391 = vmatpush1.xpose.msra.mxu0 0.0
      %392 = vmatprep.subr.mxu0 0.0
      %393 = vmatpush1.xpose.msra.mxu0 0.0
      %394 = vmatprep.subr.mxu0 0.0
      %395 = vmatpush1.xpose.msra.mxu0 0.0
      %396 = vmatprep.subr.mxu0 0.0
      %397 = vmatpush1.xpose.msra.mxu0 0.0
      %398 = vmatprep.subr.mxu0 0.0
      %399 = vmatpush1.xpose.msra.mxu0 0.0
      %400 = vmatprep.subr.mxu0 0.0
      %401 = vmatpush1.xpose.msra.mxu0 0.0
      %402 = vmatprep.subr.mxu0 0.0
      %403 = vmatpush1.xpose.msra.mxu0 0.0
      %404 = vmatprep.subr.mxu0 0.0
      %405 = vmatpush1.xpose.msra.mxu0 0.0
      %406 = vmatprep.subr.mxu0 0.0
      %407 = vmatpush1.xpose.msra.mxu0 0.0
      %408 = vmatprep.subr.mxu0 0.0
      %409 = vmatpush1.xpose.msra.mxu0 0.0
      %410 = vmatprep.subr.mxu0 0.0
      %411 = vmatpush1.xpose.msra.mxu0 0.0
      %412 = vmatprep.subr.mxu0 0.0
      %413 = vmatpush1.xpose.msra.mxu0 0.0
      %414 = vmatprep.subr.mxu0 0.0
      %415 = vmatpush1.xpose.msra.mxu0 0.0
      %416 = vmatprep.subr.mxu0 0.0
      %417 = vmatpush1.xpose.msra.mxu0 0.0
      %418 = vmatprep.subr.mxu0 0.0
      %419 = vmatpush1.xpose.msra.mxu0 0.0
      %420 = vmatprep.subr.mxu0 0.0
      %421 = vmatpush1.xpose.msra.mxu0 0.0
      %422 = vmatprep.subr.mxu0 0.0
      %423 = vmatpush1.xpose.msra.mxu0 0.0
      %424 = vmatprep.subr.mxu0 0.0
      %425 = vmatpush1.xpose.msra.mxu0 0.0
      %426 = vmatprep.subr.mxu0 0.0
      %427 = vmatpush1.xpose.msra.mxu0 0.0
      %428 = vmatprep.subr.mxu0 0.0
      %429 = vmatpush1.xpose.msra.mxu0 0.0
      %430 = vmatprep.subr.mxu0 0.0
      %431 = vmatpush1.xpose.msra.mxu0 0.0
      %432 = vmatprep.subr.mxu0 0.0
      %433 = vmatpush1.xpose.msra.mxu0 0.0
      %434 = vmatprep.subr.mxu0 0.0
      %435 = vmatpush1.xpose.msra.mxu0 0.0
      %436 = vmatprep.subr.mxu0 0.0
      %437 = vmatpush1.xpose.msra.mxu0 0.0
      %438 = vmatprep.subr.mxu0 0.0
      %439 = vmatpush1.xpose.msra.mxu0 0.0
      %440 = vmatprep.subr.mxu0 0.0
      %441 = vmatpush1.xpose.msra.mxu0 0.0
      %442 = vmatprep.subr.mxu0 0.0
      %443 = vmatpush1.xpose.msra.mxu0 0.0
      %444 = vmatprep.subr.mxu0 0.0
      %445 = vmatpush1.xpose.msra.mxu0 0.0
      %446 = vmatprep.subr.mxu0 0.0
      %447 = vmatpush1.xpose.msra.mxu0 0.0
      %448 = vmatprep.mubr.f32.mxu0 0.0
      %v449 = vand.u32 %v225, 4294901760
      %v450 = vsub.f32 %v225, %v449
      %451 = vmatmul.mubr.f32.gmra.mrb[0].mxu0 %v450
      %v452 = vpop.f32.mrb[0].mxu0
      %v453 = vadd.f32 %v379, %v452
      %v454 = vpop.f32.mrb[0].mxu0
      %455 = vdwg.mxu0
      %456 = vmatprep.subr.mxu0 0.0
      %v457 = vand.u32 %v228, 4294901760
      %458 = vmatpush1.xpose.msra.mxu0 %v457
      %459 = vmatprep.subr.mxu0 0.0
      %460 = vmatpush1.xpose.msra.mxu0 0.0
      %461 = vmatprep.subr.mxu0 0.0
      %462 = vmatpush1.xpose.msra.mxu0 0.0
      %463 = vmatprep.subr.mxu0 0.0
      %464 = vmatpush1.xpose.msra.mxu0 0.0
      %465 = vmatprep.subr.mxu0 0.0
      %466 = vmatpush1.xpose.msra.mxu0 0.0
      %467 = vmatprep.subr.mxu0 0.0
      %468 = vmatpush1.xpose.msra.mxu0 0.0
      %469 = vmatprep.subr.mxu0 0.0
      %470 = vmatpush1.xpose.msra.mxu0 0.0
      %471 = vmatprep.subr.mxu0 0.0
      %472 = vmatpush1.xpose.msra.mxu0 0.0
      %473 = vmatprep.subr.mxu0 0.0
      %474 = vmatpush1.xpose.msra.mxu0 0.0
      %475 = vmatprep.subr.mxu0 0.0
      %476 = vmatpush1.xpose.msra.mxu0 0.0
      %477 = vmatprep.subr.mxu0 0.0
      %478 = vmatpush1.xpose.msra.mxu0 0.0
      %479 = vmatprep.subr.mxu0 0.0
      %480 = vmatpush1.xpose.msra.mxu0 0.0
      %481 = vmatprep.subr.mxu0 0.0
      %482 = vmatpush1.xpose.msra.mxu0 0.0
      %483 = vmatprep.subr.mxu0 0.0
      %484 = vmatpush1.xpose.msra.mxu0 0.0
      %485 = vmatprep.subr.mxu0 0.0
      %486 = vmatpush1.xpose.msra.mxu0 0.0
      %487 = vmatprep.subr.mxu0 0.0
      %488 = vmatpush1.xpose.msra.mxu0 0.0
      %489 = vmatprep.subr.mxu0 0.0
      %490 = vmatpush1.xpose.msra.mxu0 0.0
      %491 = vmatprep.subr.mxu0 0.0
      %492 = vmatpush1.xpose.msra.mxu0 0.0
      %493 = vmatprep.subr.mxu0 0.0
      %494 = vmatpush1.xpose.msra.mxu0 0.0
      %495 = vmatprep.subr.mxu0 0.0
      %496 = vmatpush1.xpose.msra.mxu0 0.0
      %497 = vmatprep.subr.mxu0 0.0
      %498 = vmatpush1.xpose.msra.mxu0 0.0
      %499 = vmatprep.subr.mxu0 0.0
      %500 = vmatpush1.xpose.msra.mxu0 0.0
      %501 = vmatprep.subr.mxu0 0.0
      %502 = vmatpush1.xpose.msra.mxu0 0.0
      %503 = vmatprep.subr.mxu0 0.0
      %504 = vmatpush1.xpose.msra.mxu0 0.0
      %505 = vmatprep.subr.mxu0 0.0
      %506 = vmatpush1.xpose.msra.mxu0 0.0
      %507 = vmatprep.subr.mxu0 0.0
      %508 = vmatpush1.xpose.msra.mxu0 0.0
      %509 = vmatprep.subr.mxu0 0.0
      %510 = vmatpush1.xpose.msra.mxu0 0.0
      %511 = vmatprep.subr.mxu0 0.0
      %512 = vmatpush1.xpose.msra.mxu0 0.0
      %513 = vmatprep.subr.mxu0 0.0
      %514 = vmatpush1.xpose.msra.mxu0 0.0
      %515 = vmatprep.subr.mxu0 0.0
      %516 = vmatpush1.xpose.msra.mxu0 0.0
      %517 = vmatprep.subr.mxu0 0.0
      %518 = vmatpush1.xpose.msra.mxu0 0.0
      %519 = vmatprep.subr.mxu0 0.0
      %520 = vmatpush1.xpose.msra.mxu0 0.0
      %521 = vmatprep.mubr.f32.mxu0 0.0
      %v522 = vand.u32 %v225, 4294901760
      %v523 = vsub.f32 %v225, %v522
      %v524 = vand.u32 %v523, 4294901760
      %525 = vmatmul.mubr.f32.gmra.mrb[0].mxu0 %v524
      %v526 = vpop.f32.mrb[0].mxu0
      %v527 = vadd.f32 %v453, %v526
      %v528 = vpop.f32.mrb[0].mxu0
      %529 = vdwg.mxu0
      %530 = vmatprep.subr.mxu0 0.0
      %v531 = vand.u32 %v228, 4294901760
      %v532 = vsub.f32 %v228, %v531
      %v533 = vand.u32 %v532, 4294901760
      %534 = vmatpush1.xpose.msra.mxu0 %v533
      %535 = vmatprep.subr.mxu0 0.0
      %536 = vmatpush1.xpose.msra.mxu0 0.0
      %537 = vmatprep.subr.mxu0 0.0
      %538 = vmatpush1.xpose.msra.mxu0 0.0
      %539 = vmatprep.subr.mxu0 0.0
      %540 = vmatpush1.xpose.msra.mxu0 0.0
      %541 = vmatprep.subr.mxu0 0.0
      %542 = vmatpush1.xpose.msra.mxu0 0.0
      %543 = vmatprep.subr.mxu0 0.0
      %544 = vmatpush1.xpose.msra.mxu0 0.0
      %545 = vmatprep.subr.mxu0 0.0
      %546 = vmatpush1.xpose.msra.mxu0 0.0
      %547 = vmatprep.subr.mxu0 0.0
      %548 = vmatpush1.xpose.msra.mxu0 0.0
      %549 = vmatprep.subr.mxu0 0.0
      %550 = vmatpush1.xpose.msra.mxu0 0.0
      %551 = vmatprep.subr.mxu0 0.0
      %552 = vmatpush1.xpose.msra.mxu0 0.0
      %553 = vmatprep.subr.mxu0 0.0
      %554 = vmatpush1.xpose.msra.mxu0 0.0
      %555 = vmatprep.subr.mxu0 0.0
      %556 = vmatpush1.xpose.msra.mxu0 0.0
      %557 = vmatprep.subr.mxu0 0.0
      %558 = vmatpush1.xpose.msra.mxu0 0.0
      %559 = vmatprep.subr.mxu0 0.0
      %560 = vmatpush1.xpose.msra.mxu0 0.0
      %561 = vmatprep.subr.mxu0 0.0
      %562 = vmatpush1.xpose.msra.mxu0 0.0
      %563 = vmatprep.subr.mxu0 0.0
      %564 = vmatpush1.xpose.msra.mxu0 0.0
      %565 = vmatprep.subr.mxu0 0.0
      %566 = vmatpush1.xpose.msra.mxu0 0.0
      %567 = vmatprep.subr.mxu0 0.0
      %568 = vmatpush1.xpose.msra.mxu0 0.0
      %569 = vmatprep.subr.mxu0 0.0
      %570 = vmatpush1.xpose.msra.mxu0 0.0
      %571 = vmatprep.subr.mxu0 0.0
      %572 = vmatpush1.xpose.msra.mxu0 0.0
      %573 = vmatprep.subr.mxu0 0.0
      %574 = vmatpush1.xpose.msra.mxu0 0.0
      %575 = vmatprep.subr.mxu0 0.0
      %576 = vmatpush1.xpose.msra.mxu0 0.0
      %577 = vmatprep.subr.mxu0 0.0
      %578 = vmatpush1.xpose.msra.mxu0 0.0
      %579 = vmatprep.subr.mxu0 0.0
      %580 = vmatpush1.xpose.msra.mxu0 0.0
      %581 = vmatprep.subr.mxu0 0.0
      %582 = vmatpush1.xpose.msra.mxu0 0.0
      %583 = vmatprep.subr.mxu0 0.0
      %584 = vmatpush1.xpose.msra.mxu0 0.0
      %585 = vmatprep.subr.mxu0 0.0
      %586 = vmatpush1.xpose.msra.mxu0 0.0
      %587 = vmatprep.subr.mxu0 0.0
      %588 = vmatpush1.xpose.msra.mxu0 0.0
      %589 = vmatprep.subr.mxu0 0.0
      %590 = vmatpush1.xpose.msra.mxu0 0.0
      %591 = vmatprep.subr.mxu0 0.0
      %592 = vmatpush1.xpose.msra.mxu0 0.0
      %593 = vmatprep.subr.mxu0 0.0
      %594 = vmatpush1.xpose.msra.mxu0 0.0
      %595 = vmatprep.subr.mxu0 0.0
      %596 = vmatpush1.xpose.msra.mxu0 0.0
      %597 = vmatprep.mubr.f32.mxu0 0.0
      %v598 = vand.u32 %v225, 4294901760
      %599 = vmatmul.mubr.f32.gmra.mrb[0].mxu0 %v598
      %v600 = vpop.f32.mrb[0].mxu0
      %v601 = vadd.f32 %v527, %v600
      %v602 = vpop.f32.mrb[0].mxu0
      %603 = vdwg.mxu0
      %604 = vmatprep.subr.mxu0 0.0
      %v605 = vand.u32 %v228, 4294901760
      %606 = vmatpush1.xpose.msra.mxu0 %v605
      %607 = vmatprep.subr.mxu0 0.0
      %608 = vmatpush1.xpose.msra.mxu0 0.0
      %609 = vmatprep.subr.mxu0 0.0
      %610 = vmatpush1.xpose.msra.mxu0 0.0
      %611 = vmatprep.subr.mxu0 0.0
      %612 = vmatpush1.xpose.msra.mxu0 0.0
      %613 = vmatprep.subr.mxu0 0.0
      %614 = vmatpush1.xpose.msra.mxu0 0.0
      %615 = vmatprep.subr.mxu0 0.0
      %616 = vmatpush1.xpose.msra.mxu0 0.0
      %617 = vmatprep.subr.mxu0 0.0
      %618 = vmatpush1.xpose.msra.mxu0 0.0
      %619 = vmatprep.subr.mxu0 0.0
      %620 = vmatpush1.xpose.msra.mxu0 0.0
      %621 = vmatprep.subr.mxu0 0.0
      %622 = vmatpush1.xpose.msra.mxu0 0.0
      %623 = vmatprep.subr.mxu0 0.0
      %624 = vmatpush1.xpose.msra.mxu0 0.0
      %625 = vmatprep.subr.mxu0 0.0
      %626 = vmatpush1.xpose.msra.mxu0 0.0
      %627 = vmatprep.subr.mxu0 0.0
      %628 = vmatpush1.xpose.msra.mxu0 0.0
      %629 = vmatprep.subr.mxu0 0.0
      %630 = vmatpush1.xpose.msra.mxu0 0.0
      %631 = vmatprep.subr.mxu0 0.0
      %632 = vmatpush1.xpose.msra.mxu0 0.0
      %633 = vmatprep.subr.mxu0 0.0
      %634 = vmatpush1.xpose.msra.mxu0 0.0
      %635 = vmatprep.subr.mxu0 0.0
      %636 = vmatpush1.xpose.msra.mxu0 0.0
      %637 = vmatprep.subr.mxu0 0.0
      %638 = vmatpush1.xpose.msra.mxu0 0.0
      %639 = vmatprep.subr.mxu0 0.0
      %640 = vmatpush1.xpose.msra.mxu0 0.0
      %641 = vmatprep.subr.mxu0 0.0
      %642 = vmatpush1.xpose.msra.mxu0 0.0
      %643 = vmatprep.subr.mxu0 0.0
      %644 = vmatpush1.xpose.msra.mxu0 0.0
      %645 = vmatprep.subr.mxu0 0.0
      %646 = vmatpush1.xpose.msra.mxu0 0.0
      %647 = vmatprep.subr.mxu0 0.0
      %648 = vmatpush1.xpose.msra.mxu0 0.0
      %649 = vmatprep.subr.mxu0 0.0
      %650 = vmatpush1.xpose.msra.mxu0 0.0
      %651 = vmatprep.subr.mxu0 0.0
      %652 = vmatpush1.xpose.msra.mxu0 0.0
      %653 = vmatprep.subr.mxu0 0.0
      %654 = vmatpush1.xpose.msra.mxu0 0.0
      %655 = vmatprep.subr.mxu0 0.0
      %656 = vmatpush1.xpose.msra.mxu0 0.0
      %657 = vmatprep.subr.mxu0 0.0
      %658 = vmatpush1.xpose.msra.mxu0 0.0
      %659 = vmatprep.subr.mxu0 0.0
      %660 = vmatpush1.xpose.msra.mxu0 0.0
      %661 = vmatprep.subr.mxu0 0.0
      %662 = vmatpush1.xpose.msra.mxu0 0.0
      %663 = vmatprep.subr.mxu0 0.0
      %664 = vmatpush1.xpose.msra.mxu0 0.0
      %665 = vmatprep.subr.mxu0 0.0
      %666 = vmatpush1.xpose.msra.mxu0 0.0
      %667 = vmatprep.subr.mxu0 0.0
      %668 = vmatpush1.xpose.msra.mxu0 0.0
      %669 = vmatprep.mubr.f32.mxu0 0.0
      %v670 = vand.u32 %v225, 4294901760
      %671 = vmatmul.mubr.f32.gmra.mrb[0].mxu0 %v670
      %v672 = vpop.f32.mrb[0].mxu0
      %v673 = vadd.f32 %v601, %v672
      %v674 = vpop.f32.mrb[0].mxu0
      %675 = vdwg.mxu0
      %vm676 = vcmask 64512
      %v677 = vsel %vm676, %v673, -inf
      %678 = vmax.xlane.f32.xlu0 %v677
      %v679 = vpop.xlane.xlu0 %678
      %v680 = vld [vmem:[#allocation2] sm:$0xff]
      %v681 = vmax.f32 %v680, %v679
      %v682 = vld [vmem:[#allocation3] sm:$0xff]
      %v683 = vsub.f32 %v680, %v681
      %v684 = vmul.f32 %v683, 1.442695
      %v685 = vpow.pop %v684
      %v686 = vmul.f32 %v682, %v685
      %688 = vset.pattern.permute.xlu0 0
      %689 = vperm.xlu0 %688, %v681
      %v690 = vpop.permute.xlu0 %689
      %v692 = vsub.f32 %v673, %v690
      %v693 = vmul.f32 %v692, 1.442695
      %v694 = vpow.pop %v693
      %v695 = vsel %vm676, %v694, 0.0
      %696 = vadd.xlane.f32.xlu0 %v695
      %v697 = vpop.xlane.xlu0 %696
      %v698 = vadd.f32 %v686, %v697
      %vm699 = vcmask 7168
      %700 = vst.msk [vmem:[#allocation3] sm:$0xff] %vm699, %v698
      %701 = vst.msk [vmem:[#allocation2] sm:$0xff] %vm699, %v681
      %p702 = scmp.eq.s32.totalorder %s20, 2
      // Predicated region
      $region33: #{clip_loss.1} parent=27 // pred_check
        %p703 = pneg %p702
      $region34: #{clip_loss.1} parent=27 // pred_check_branch
        %705 = sbr.rel (%p703) target = $region36
      $region35: #{clip_loss.1} parent=27 // pred_region
        %v706 = vld [vmem:[#allocation2] sm:$0xff]
        %v707 = vld [vmem:[#allocation3] sm:$0xff]
        %v708 = vlog2.pop %v707
        %v709 = vmul.f32 %v708, 0.6931472
        %v710 = vadd.f32 %v706, %v709
        %711 = vst.msk [vmem:[%s206] sm:$0xff] %vm699, %v710
      $region36: #{clip_loss.1} parent=27 // pred_fallthru
        _
      %v712 = vrot.slane %v677, 4
      %v713 = vmax.f32 %v677, %v712
      %v714 = vrot.slane %v713, 2
      %v715 = vmax.f32 %v713, %v714
      %v716 = vrot.slane %v715, 1
      %v717 = vmax.f32 %v715, %v716
      %v718 = vsub.f32 %v673, %v717
      %v719 = vmul.f32 %v718, 1.442695
      %v720 = vpow.pop %v719
      %v721 = vsel %vm676, %v720, 0.0
      %v722 = vrot.slane %v721, 4
      %v723 = vadd.f32 %v721, %v722
      %v724 = vrot.slane %v723, 2
      %v725 = vadd.f32 %v723, %v724
      %v726 = vrot.slane %v725, 1
      %v727 = vadd.f32 %v725, %v726
      %v728 = vlog2.pop %v727
      %v729 = vmul.f32 %v728, 0.6931472
      %v730 = vadd.f32 %v717, %v729
      %vm731 = vcmask 57344
      %732 = vst.msk [vmem:[%s213] sm:$0x1] %vm731, %v730
      %p733 = scmp.lt.s32.totalorder %s19, 2
      %s734 = scalar_select %p733, %s19, 2
      %s735 = smul.addr %s734, 8
      %s736 = scalar_lea.vmem %s2, %s735
      %p737 = scmp.lt.s32.totalorder %s19, 2
      %s738 = scalar_select %p737, %s19, 2
      %p739 = scmp.lt.s32.totalorder %s20, 2
      %s740 = scalar_select %p739, %s20, 2
      %s741 = smul.addr %s738, 3
      %s742 = sadd.s32 %s740, %s741
      %s743 = scalar_lea.vmem %s3, %s742
      // Predicated region
      $region37: #{clip_loss.1} parent=27 // pred_check
        %p744 = pneg %p97
      $region38: #{clip_loss.1} parent=27 // pred_check_branch
        %746 = sbr.rel (%p744) target = $region40
      $region39: #{clip_loss.1} parent=27 // pred_region
        _
      $region40: #{clip_loss.1} parent=27 // pred_fallthru
        _
      // Predicated region
      $region41: #{clip_loss.1} parent=27 // pred_check
        %p747 = pneg %p125
      $region42: #{clip_loss.1} parent=27 // pred_check_branch
        %749 = sbr.rel (%p747) target = $region44
      $region43: #{clip_loss.1} parent=27 // pred_region
        _
      $region44: #{clip_loss.1} parent=27 // pred_fallthru
        _
    $region28: #{clip_loss.1} parent=5 // pred_fallthru
      _
    %p750 = scmp.le.s32.totalorder 2, %s10
    // Predicated region
    $region45: #{clip_loss.1} parent=5 // pred_check
      %p751 = pneg %p750
    $region46: #{clip_loss.1} parent=5 // pred_check_branch
      %753 = sbr.rel (%p751) target = $region48
    $region47: #{clip_loss.1} parent=5 // pred_region
      %s754 = ssub.s32 %s10, 2
      // Predicated region
      $region49: #{clip_loss.1} parent=47 // pred_check
        %p755 = pneg %p103
      $region50: #{clip_loss.1} parent=47 // pred_check_branch
        %757 = sbr.rel (%p755) target = $region52
      $region51: #{clip_loss.1} parent=47 // pred_region
        %p758 = scmp.lt.s32.totalorder %s21, 2
        %s759 = scalar_select %p758, %s21, 2
        %s760 = smul.addr %s759, 8
        %s761 = scalar_lea.vmem %s2, %s760
      $region52: #{clip_loss.1} parent=47 // pred_fallthru
        _
      // Predicated region
      $region53: #{clip_loss.1} parent=47 // pred_check
        %p762 = pneg %p131
      $region54: #{clip_loss.1} parent=47 // pred_check_branch
        %764 = sbr.rel (%p762) target = $region56
      $region55: #{clip_loss.1} parent=47 // pred_region
        %p765 = scmp.lt.s32.totalorder %s21, 2
        %s766 = scalar_select %p765, %s21, 2
        %p767 = scmp.lt.s32.totalorder %s22, 2
        %s768 = scalar_select %p767, %s22, 2
        %s769 = smul.addr %s766, 3
        %s770 = sadd.s32 %s768, %s769
        %s771 = scalar_lea.vmem %s3, %s770
      $region56: #{clip_loss.1} parent=47 // pred_fallthru
        _
    $region48: #{clip_loss.1} parent=5 // pred_fallthru
      _
  $region6: #{clip_loss.1} parent=0 // loop_footer
    %s14 = sadd.s32 1, %s10
  $region7: #{clip_loss.1} parent=0 // loop_footer_branch
    %9 = sbr.rel target = $region3
  $region8: #{clip_loss.1} parent=0 // loop_exit
    _

</llo_original>
